<compile_context>
chip_gen: v5e
topology: v5e:2x2
jax: 0.10.0
libtpu: 0.0.40
codegen_flags: <defaults>
</compile_context>

<pallas_src>
import functools

import jax
import jax.numpy as jnp
from jax.experimental import pallas as pl
from jax.experimental.pallas import tpu as pltpu


def _round_up(x, m):
    return ((x + m - 1) // m) * m


def actor_kernel(x_ref, w1_ref, b1_ref, w2_ref, b2_ref, o_ref):
    a = o_ref.shape[-1]  # real action dim (unpadded)

    # Layer 1: cast x f32 -> bf16 on the VPU (input stream stays f32 in HBM),
    # MXU matmul with f32 accumulation, bias + ReLU in f32.
    x_bf = x_ref[...].astype(jnp.bfloat16)
    h = jnp.dot(x_bf, w1_ref[...], preferred_element_type=jnp.float32)
    h = jnp.maximum(h + b1_ref[...], 0.0)

    # Layer 2: bf16 MXU matmul at lane-dense width A_pad (=128), then slice
    # down to the real action dim before bias + tanh + store.
    y = jnp.dot(h.astype(w2_ref.dtype), w2_ref[...],
                preferred_element_type=jnp.float32)
    y = y[:, :a] + b2_ref[...]
    o_ref[...] = jnp.tanh(y).astype(o_ref.dtype)


def prepare_actor_params(w1, b1, w2, b2):
    """One-time parameter prep (hoisted out of the per-call path):
       bf16 matmul weights, W2 zero-padded to a multiple of 128 lanes."""
    H, A = w2.shape
    A_pad = _round_up(A, 128)
    w1_bf = w1.astype(jnp.bfloat16)
    w2_bf = jnp.pad(w2, ((0, 0), (0, A_pad - A))).astype(jnp.bfloat16)
    return w1_bf, b1.astype(jnp.float32), w2_bf, b2.astype(jnp.float32)


@functools.partial(jax.jit, static_argnames=("tile_b",))
def actor_forward(x, w1_bf, b1, w2_bf, b2, *, tile_b=1024):
    """x: [B, E] float32 -> [B, A] float32 (matches PyTorch y = x @ W.T + b)."""
    B_orig, _ = x.shape
    # Degenerate tiny batch: pad to the 8-sublane minimum (cheap, rare).
    if B_orig < 8:
        x = jnp.pad(x, ((0, 8 - B_orig), (0, 0)))
    B, E = x.shape
    H = w1_bf.shape[1]
    A_pad = w2_bf.shape[1]
    A = b2.shape[-1]

    # Tile selection: multiple of 8 rows; aim for >= 2 grid steps when the
    # batch allows it (pipelining + both TCs on v7x), capped at tile_b.
    TILE_B = max(8, min(tile_b, _round_up(pl.cdiv(B, 2), 8)))
    num_tiles = pl.cdiv(B, TILE_B)

    # NOTE: if tile_b or E grows large, check double-buffered x/out blocks
    # against scoped VMEM (16 MiB default on v5e, 32 MiB on v6e/v7x) and set
    # pltpu.CompilerParams(vmem_limit_bytes=...) accordingly.
    out = pl.pallas_call(
        actor_kernel,
        out_shape=jax.ShapeDtypeStruct((B, A), jnp.float32),
        grid=(num_tiles,),
        in_specs=[
            pl.BlockSpec((TILE_B, E), lambda i: (i, 0)),   # x: blocked on batch (f32)
            pl.BlockSpec((E, H), lambda i: (0, 0)),        # W1: VMEM-resident (bf16)
            pl.BlockSpec((1, H), lambda i: (0, 0)),        # b1: VMEM-resident (f32)
            pl.BlockSpec((H, A_pad), lambda i: (0, 0)),    # W2: VMEM-resident (bf16)
            pl.BlockSpec((1, A), lambda i: (0, 0)),        # b2: VMEM-resident (f32)
        ],
        out_specs=pl.BlockSpec((TILE_B, A), lambda i: (i, 0)),
        compiler_params=pltpu.CompilerParams(
            dimension_semantics=("parallel",),             # batch is data-independent
        ),
    )(x, w1_bf, b1, w2_bf, b2)

    if B_orig != B:
        out = out[:B_orig]
    return out


def init_actor_params(key, embedding_dim, action_dim, hidden=128):
    """Mirrors PyTorch nn.Linear default init (U[-1/sqrt(fan_in), +1/sqrt(fan_in)]),
    weights stored [in_features, out_features] so the kernel does x @ W + b."""
    k1, k2, k3, k4 = jax.random.split(key, 4)
    bound1 = 1.0 / jnp.sqrt(embedding_dim)
    bound2 = 1.0 / jnp.sqrt(hidden)
    w1 = jax.random.uniform(k1, (embedding_dim, hidden), jnp.float32, -bound1, bound1)
    b1 = jax.random.uniform(k2, (1, hidden), jnp.float32, -bound1, bound1)
    w2 = jax.random.uniform(k3, (hidden, action_dim), jnp.float32, -bound2, bound2)
    b2 = jax.random.uniform(k4, (1, action_dim), jnp.float32, -bound2, bound2)
    return w1, b1, w2, b2


if __name__ == "__main__":
    key = jax.random.PRNGKey(0)
    k_in, k_params = jax.random.split(key)

    B = 8               # small batch of state embeddings
    embedding_dim = 32
    action_dim = 8

    x = jax.random.normal(k_in, (B, embedding_dim), jnp.float32)
    w1, b1, w2, b2 = init_actor_params(k_params, embedding_dim, action_dim)

    # One-time parameter prep (bf16 cast + lane padding), outside the hot path.
    w1_bf, b1_p, w2_bf, b2_p = prepare_actor_params(w1, b1, w2, b2)

    out = actor_forward(x, w1_bf, b1_p, w2_bf, b2_p)
    out = jax.block_until_ready(out)

    # Pure-JAX f32 reference of the same math (bf16 matmul inputs => loosen tol).
    ref = jnp.tanh(jnp.maximum(x @ w1 + b1, 0.0) @ w2 + b2)
    assert out.shape == (B, action_dim)
    assert jnp.allclose(out, ref, atol=2e-2, rtol=2e-2), (
        float(jnp.max(jnp.abs(out - ref)))
    )

    print("KERNEL_OK")
</pallas_src>

<mosaic_0001>
module attributes {stable_mosaic.version = 11 : i64} {
  func.func @actor_kernel(%arg0: i32, %arg1: memref<8x32xf32, #tpu.memory_space<vmem>>, %arg2: memref<32x128xbf16, #tpu.memory_space<vmem>>, %arg3: memref<1x128xf32, #tpu.memory_space<vmem>>, %arg4: memref<128x128xbf16, #tpu.memory_space<vmem>>, %arg5: memref<1x8xf32, #tpu.memory_space<vmem>>, %arg6: memref<8x8xf32, #tpu.memory_space<vmem>>) attributes {dimension_semantics = [#tpu.dimension_semantics<parallel>], iteration_bounds = array<i64: 1>, scalar_prefetch = 0 : i64, scratch_operands = 0 : i64, tpu.core_type = #tpu.core_type<tc>, window_params = [{transform_indices = @transform_0, window_bounds = array<i64: 8, 32>}, {pipeline_mode = #tpu.pipeline_mode<synchronous>, transform_indices = @transform_1, window_bounds = array<i64: 32, 128>}, {pipeline_mode = #tpu.pipeline_mode<synchronous>, transform_indices = @transform_2, window_bounds = array<i64: 1, 128>}, {pipeline_mode = #tpu.pipeline_mode<synchronous>, transform_indices = @transform_3, window_bounds = array<i64: 128, 128>}, {pipeline_mode = #tpu.pipeline_mode<synchronous>, transform_indices = @transform_4, window_bounds = array<i64: 1, 8>}, {transform_indices = @transform_5, window_bounds = array<i64: 8, 8>}]} {
    %c0 = arith.constant 0 : index
    %c0_0 = arith.constant 0 : index
    %0 = vector.load %arg1[%c0, %c0_0] : memref<8x32xf32, #tpu.memory_space<vmem>>, vector<8x32xf32>
    %1 = arith.truncf %0 : vector<8x32xf32> to vector<8x32xbf16>
    %c0_1 = arith.constant 0 : index
    %c0_2 = arith.constant 0 : index
    %2 = vector.load %arg2[%c0_1, %c0_2] : memref<32x128xbf16, #tpu.memory_space<vmem>>, vector<32x128xbf16>
    %cst = arith.constant dense<0.000000e+00> : vector<8x128xf32>
    %3 = tpu.matmul %1, %2, %cst {dimension_numbers = #tpu.dot_dimension_numbers<[1], [0], [0], [1], [0, 0, 1, 1], [], []>} : vector<8x32xbf16>, vector<32x128xbf16>, vector<8x128xf32> -> vector<8x128xf32>
    %c0_3 = arith.constant 0 : index
    %c0_4 = arith.constant 0 : index
    %4 = vector.load %arg3[%c0_3, %c0_4] : memref<1x128xf32, #tpu.memory_space<vmem>>, vector<1x128xf32>
    %5 = vector.broadcast %4 : vector<1x128xf32> to vector<8x128xf32>
    %6 = arith.addf %3, %5 : vector<8x128xf32>
    %cst_5 = arith.constant 0.000000e+00 : f32
    %7 = vector.broadcast %cst_5 : f32 to vector<8x128xf32>
    %8 = arith.maximumf %6, %7 : vector<8x128xf32>
    %9 = arith.truncf %8 : vector<8x128xf32> to vector<8x128xbf16>
    %c0_6 = arith.constant 0 : index
    %c0_7 = arith.constant 0 : index
    %10 = vector.load %arg4[%c0_6, %c0_7] : memref<128x128xbf16, #tpu.memory_space<vmem>>, vector<128x128xbf16>
    %cst_8 = arith.constant dense<0.000000e+00> : vector<8x128xf32>
    %11 = tpu.matmul %9, %10, %cst_8 {dimension_numbers = #tpu.dot_dimension_numbers<[1], [0], [0], [1], [0, 0, 1, 1], [], []>} : vector<8x128xbf16>, vector<128x128xbf16>, vector<8x128xf32> -> vector<8x128xf32>
    %12 = vector.extract_strided_slice %11 {offsets = [0, 0], sizes = [8, 8], strides = [1, 1]} : vector<8x128xf32> to vector<8x8xf32>
    %c0_9 = arith.constant 0 : index
    %c0_10 = arith.constant 0 : index
    %13 = vector.load %arg5[%c0_9, %c0_10] : memref<1x8xf32, #tpu.memory_space<vmem>>, vector<1x8xf32>
    %14 = vector.broadcast %13 : vector<1x8xf32> to vector<8x8xf32>
    %15 = arith.addf %12, %14 : vector<8x8xf32>
    %16 = math.tanh %15 : vector<8x8xf32>
    %c0_11 = arith.constant 0 : index
    %c0_12 = arith.constant 0 : index
    %17 = vector.load %arg6[%c0_11, %c0_12] : memref<8x8xf32, #tpu.memory_space<vmem>>, vector<8x8xf32>
    tpu.vector_store %arg6[%c0_11, %c0_12], %16 {strides = array<i32>} : memref<8x8xf32, #tpu.memory_space<vmem>>, vector<8x8xf32>,
    return
  }
  func.func @transform_0(%arg0: i32) -> (i32, i32) {
    %c0_i32 = arith.constant 0 : i32
    %c0_i32_0 = arith.constant 0 : i32
    return %arg0, %c0_i32 : i32, i32
  }
  func.func @transform_1(%arg0: i32) -> (i32, i32) {
    %c0_i32 = arith.constant 0 : i32
    %c0_i32_0 = arith.constant 0 : i32
    %c0_i32_1 = arith.constant 0 : i32
    return %c0_i32, %c0_i32_0 : i32, i32
  }
  func.func @transform_2(%arg0: i32) -> (i32, i32) {
    %c0_i32 = arith.constant 0 : i32
    %c0_i32_0 = arith.constant 0 : i32
    %c0_i32_1 = arith.constant 0 : i32
    return %c0_i32, %c0_i32_0 : i32, i32
  }
  func.func @transform_3(%arg0: i32) -> (i32, i32) {
    %c0_i32 = arith.constant 0 : i32
    %c0_i32_0 = arith.constant 0 : i32
    %c0_i32_1 = arith.constant 0 : i32
    return %c0_i32, %c0_i32_0 : i32, i32
  }
  func.func @transform_4(%arg0: i32) -> (i32, i32) {
    %c0_i32 = arith.constant 0 : i32
    %c0_i32_0 = arith.constant 0 : i32
    %c0_i32_1 = arith.constant 0 : i32
    return %c0_i32, %c0_i32_0 : i32, i32
  }
  func.func @transform_5(%arg0: i32) -> (i32, i32) {
    %c0_i32 = arith.constant 0 : i32
    %c0_i32_0 = arith.constant 0 : i32
    return %arg0, %c0_i32 : i32, i32
  }
}

</mosaic_0001>

<llo_original>
// kernel: actor_forward.1
$region0: #{actor_forward.1}
  #allocation0 [shape = 'u32[]', space=smem, size = 0x4, offset = 0x4, fixed_abs, tag = 'smem constant byte address 0x4 - core index']
  #allocation1 [shape = 'u32[72,128]{1,0:T(1,128)}', space=vmem, size = 0x9000, scoped, tag = 'internal scratch']
  %s0 = inlined_call_operand.hbm [shape: f32[8,32], index: 0, kind: input, shape index: {}]
  %s1 = inlined_call_operand.hbm [shape: bf16[32,128], index: 1, kind: input, shape index: {}]
  %s2 = inlined_call_operand.vmem [shape: f32[1,128], index: 2, kind: input, shape index: {}]
  %s3 = inlined_call_operand.hbm [shape: bf16[128,128], index: 3, kind: input, shape index: {}]
  %s4 = inlined_call_operand.vmem [shape: f32[1,8], index: 4, kind: input, shape index: {}]
  %s5 = inlined_call_operand.hbm [shape: f32[8,8], index: 5, kind: output, shape index: {}]
  %s6 = sld [smem:[#allocation0]]
  $region42: #{actor_forward.1} parent=0
    _
  %s8 = ssub.s32 1, %s6
  %s9 = scalar_select 0, %s8, %s6
  $region1: #{actor_forward.1} parent=0
    #allocation2 [shape = 'u8[4096]{0}', space=vmem, size = 0x1000, scoped, tag = 'input window, operand 0, single buffered']
    #allocation3 [shape = 's32[1]{0}', space=sflag, size = 0x4, scoped, tag = 'scoped memory for actor_forward.1']
    #allocation4 [shape = 's32[1]{0}', space=sflag, size = 0x4, scoped, tag = 'scoped memory for actor_forward.1']
    #allocation5 [shape = 'u8[8192]{0}', space=vmem, size = 0x2000, scoped, tag = 'input window, operand 1, single buffered']
    #allocation6 [shape = 's32[1]{0}', space=sflag, size = 0x4, scoped, tag = 'scoped memory for actor_forward.1']
    #allocation7 [shape = 'u8[32768]{0}', space=vmem, size = 0x8000, scoped, tag = 'input window, operand 3, single buffered']
    #allocation8 [shape = 'u8[4096]{0}', space=vmem, size = 0x1000, scoped, tag = 'output window, operand 0, single buffered']
    %10 = vsyncpa [#allocation3], 0
    %11 = vsyncpa [#allocation6], 0
    %12 = vsyncpa [#allocation4], 0
    // Predicated region
    $region2: #{actor_forward.1} parent=1 // pred_check
      _
    $region3: #{actor_forward.1} parent=1 // pred_check_branch
      %14 = sbr.rel (0) target = $region5
    $region4: #{actor_forward.1} parent=1 // pred_region
      %16 = vsyncadd [#allocation3], 0
      %s18 = sshll.u32 %s0, 4
      %s19 = int_to_ptr.hbm [resolvable:$true] %s18
      %s20 = sshll.u32 [#allocation2], 4
      %s21 = int_to_ptr.vmem [resolvable:$true] %s20
      %23 = dma.hbm_to_vmem [thread:$0]  %s19, 128, %s21, [#allocation3]
    $region5: #{actor_forward.1} parent=1 // pred_fallthru
      _
    // Predicated region
    $region6: #{actor_forward.1} parent=1 // pred_check
      _
    $region7: #{actor_forward.1} parent=1 // pred_check_branch
      %25 = sbr.rel (0) target = $region9
    $region8: #{actor_forward.1} parent=1 // pred_region
      %27 = vsyncadd [#allocation6], 0
      %s28 = sshll.u32 %s1, 4
      %s29 = int_to_ptr.hbm [resolvable:$true] %s28
      %s30 = sshll.u32 [#allocation5], 4
      %s31 = int_to_ptr.vmem [resolvable:$true] %s30
      %36 = dma.hbm_to_vmem [thread:$0]  %s29, 256, %s31, [#allocation6], 64, 64, 4
    $region9: #{actor_forward.1} parent=1 // pred_fallthru
      _
    // Predicated region
    $region10: #{actor_forward.1} parent=1 // pred_check
      _
    $region11: #{actor_forward.1} parent=1 // pred_check_branch
      %38 = sbr.rel (0) target = $region13
    $region12: #{actor_forward.1} parent=1 // pred_region
      _
    $region13: #{actor_forward.1} parent=1 // pred_fallthru
      _
    // Predicated region
    $region14: #{actor_forward.1} parent=1 // pred_check
      _
    $region15: #{actor_forward.1} parent=1 // pred_check_branch
      %40 = sbr.rel (0) target = $region17
    $region16: #{actor_forward.1} parent=1 // pred_region
      %42 = vsyncadd [#allocation6], 0
      %s43 = sshll.u32 %s3, 4
      %s44 = int_to_ptr.hbm [resolvable:$true] %s43
      %s45 = sshll.u32 [#allocation7], 4
      %s46 = int_to_ptr.vmem [resolvable:$true] %s45
      %51 = dma.hbm_to_vmem [thread:$0]  %s44, 1024, %s46, [#allocation6], 64, 64, 4
    $region17: #{actor_forward.1} parent=1 // pred_fallthru
      _
    // Predicated region
    $region18: #{actor_forward.1} parent=1 // pred_check
      _
    $region19: #{actor_forward.1} parent=1 // pred_check_branch
      %53 = sbr.rel (0) target = $region21
    $region20: #{actor_forward.1} parent=1 // pred_region
      _
    $region21: #{actor_forward.1} parent=1 // pred_fallthru
      _
    // Predicated region
    $region22: #{actor_forward.1} parent=1 // pred_check
      _
    $region23: #{actor_forward.1} parent=1 // pred_check_branch
      %55 = sbr.rel (0) target = $region25
    $region24: #{actor_forward.1} parent=1 // pred_region
      %57 = dma.done [#allocation3], 128
    $region25: #{actor_forward.1} parent=1 // pred_fallthru
      _
    // Predicated region
    $region26: #{actor_forward.1} parent=1 // pred_check
      _
    $region27: #{actor_forward.1} parent=1 // pred_check_branch
      %59 = sbr.rel (0) target = $region29
    $region28: #{actor_forward.1} parent=1 // pred_region
      %61 = dma.done [#allocation6], 256
    $region29: #{actor_forward.1} parent=1 // pred_fallthru
      _
    // Predicated region
    $region30: #{actor_forward.1} parent=1 // pred_check
      _
    $region31: #{actor_forward.1} parent=1 // pred_check_branch
      %63 = sbr.rel (0) target = $region33
    $region32: #{actor_forward.1} parent=1 // pred_region
      %65 = dma.done [#allocation6], 1024
    $region33: #{actor_forward.1} parent=1 // pred_fallthru
      _
    %v67 = vld [vmem:[#allocation2] sm:$0xff]
    %v68 = vpack.c.bf16 %v67, %v67
    %v69 = vld [vmem:[#allocation5] sm:$0xf]
    %v70 = vld [vmem:[#allocation5 + $0x4] sm:$0xf]
    %v71 = vld [vmem:[#allocation5 + $0x8] sm:$0xf]
    %v72 = vld [vmem:[#allocation5 + $0xc] sm:$0xf]
    %v73 = vld [vmem:[%s2] sm:$0x1]
    %v75 = vperm.slane %v73, 0
    %v81 = vunpack.c.l.b16 %v69
    %v82 = vunpack.c.l.b16 %v70
    %v83 = vunpack.c.l.b16 %v71
    %v84 = vunpack.c.l.b16 %v72
    %v85 = vpack.c.b16 %v82, %v81
    %v86 = vpack.c.b16 %v84, %v83
    %vm89 = vcmask 261120
    %v91 = vsel %vm89, %v68, 0
    %93 = vmatpush.bf16.msra.mxu0 0
    %94 = vmatpush.bf16.msra.mxu0 0
    %95 = vmatpush.bf16.msra.mxu0 0
    %96 = vmatpush.bf16.msra.mxu0 0
    %97 = vmatpush.bf16.msra.mxu0 0
    %98 = vmatpush.bf16.msra.mxu0 0
    %99 = vmatpush.bf16.msra.mxu0 %v86
    %100 = vmatpush.bf16.msra.mxu0 %v85
    %101 = vmatmul.bf16.gmra.mxu0 %v91
    %v102 = vpop.f32.mrf.mxu0
    %v103 = vadd.f32 %v75, %v102
    %v104 = vpop.f32.mrf.mxu0
    %105 = vdwg.mxu0
    %v106 = vmax.f32 %v103, 0.0
    %v107 = vpack.c.bf16 %v106, %v106
    %v108 = vld [vmem:[#allocation7] sm:$0xf]
    %v109 = vld [vmem:[#allocation7 + $0x4] sm:$0xf]
    %v110 = vld [vmem:[#allocation7 + $0x8] sm:$0xf]
    %v111 = vld [vmem:[#allocation7 + $0xc] sm:$0xf]
    %v112 = vld [vmem:[#allocation7 + $0x10] sm:$0xf]
    %v113 = vld [vmem:[#allocation7 + $0x14] sm:$0xf]
    %v114 = vld [vmem:[#allocation7 + $0x18] sm:$0xf]
    %v115 = vld [vmem:[#allocation7 + $0x1c] sm:$0xf]
    %v116 = vld [vmem:[#allocation7 + $0x20] sm:$0xf]
    %v117 = vld [vmem:[#allocation7 + $0x24] sm:$0xf]
    %v118 = vld [vmem:[#allocation7 + $0x28] sm:$0xf]
    %v119 = vld [vmem:[#allocation7 + $0x2c] sm:$0xf]
    %v120 = vld [vmem:[#allocation7 + $0x30] sm:$0xf]
    %v121 = vld [vmem:[#allocation7 + $0x34] sm:$0xf]
    %v122 = vld [vmem:[#allocation7 + $0x38] sm:$0xf]
    %v123 = vld [vmem:[#allocation7 + $0x3c] sm:$0xf]
    %v140 = vunpack.c.l.b16 %v108
    %v141 = vunpack.c.l.b16 %v109
    %v142 = vunpack.c.l.b16 %v110
    %v143 = vunpack.c.l.b16 %v111
    %v144 = vunpack.c.l.b16 %v112
    %v145 = vunpack.c.l.b16 %v113
    %v146 = vunpack.c.l.b16 %v114
    %v147 = vunpack.c.l.b16 %v115
    %v148 = vunpack.c.l.b16 %v116
    %v149 = vunpack.c.l.b16 %v117
    %v150 = vunpack.c.l.b16 %v118
    %v151 = vunpack.c.l.b16 %v119
    %v152 = vunpack.c.l.b16 %v120
    %v153 = vunpack.c.l.b16 %v121
    %v154 = vunpack.c.l.b16 %v122
    %v155 = vunpack.c.l.b16 %v123
    %v156 = vpack.c.b16 %v141, %v140
    %v157 = vpack.c.b16 %v143, %v142
    %v158 = vpack.c.b16 %v145, %v144
    %v159 = vpack.c.b16 %v147, %v146
    %v160 = vpack.c.b16 %v149, %v148
    %v161 = vpack.c.b16 %v151, %v150
    %v162 = vpack.c.b16 %v153, %v152
    %v163 = vpack.c.b16 %v155, %v154
    %172 = vmatpush.bf16.msra.mxu0 %v163
    %173 = vmatpush.bf16.msra.mxu0 %v162
    %174 = vmatpush.bf16.msra.mxu0 %v161
    %175 = vmatpush.bf16.msra.mxu0 %v160
    %176 = vmatpush.bf16.msra.mxu0 %v159
    %177 = vmatpush.bf16.msra.mxu0 %v158
    %178 = vmatpush.bf16.msra.mxu0 %v157
    %179 = vmatpush.bf16.msra.mxu0 %v156
    %180 = vmatmul.bf16.gmra.mxu0 %v107
    %v181 = vpop.f32.mrf.mxu0
    %v182 = vadd.f32 0.0, %v181
    %v183 = vpop.f32.mrf.mxu0
    %184 = vdwg.mxu0
    %v185 = vld [vmem:[%s4] sm:$0x1]
    %v187 = vperm.slane %v185, 0
    %v189 = vadd.f32 %v182, %v187
    %v190 = vtanh.pop %v189
    %vm191 = vcmask 64512
    %192 = vst.msk [vmem:[#allocation8] sm:$0xff] %vm191, %v190
    // Predicated region
    $region34: #{actor_forward.1} parent=1 // pred_check
      _
    $region35: #{actor_forward.1} parent=1 // pred_check_branch
      %194 = sbr.rel (0) target = $region37
    $region36: #{actor_forward.1} parent=1 // pred_region
      %196 = vsyncadd [#allocation4], 0
      %s198 = sshll.u32 [#allocation8], 4
      %s199 = int_to_ptr.vmem [resolvable:$true] %s198
      %s200 = sshll.u32 %s5, 4
      %s201 = int_to_ptr.hbm [resolvable:$true] %s200
      %203 = dma.vmem_to_hbm [thread:$0]  %s199, 128, %s201, [#allocation4]
    $region37: #{actor_forward.1} parent=1 // pred_fallthru
      _
    // Predicated region
    $region38: #{actor_forward.1} parent=1 // pred_check
      _
    $region39: #{actor_forward.1} parent=1 // pred_check_branch
      %205 = sbr.rel (0) target = $region41
    $region40: #{actor_forward.1} parent=1 // pred_region
      %207 = dma.done [#allocation4], 128
    $region41: #{actor_forward.1} parent=1 // pred_fallthru
      _
    %208 = vsyncpa [#allocation3], 1
    %209 = vsyncpa [#allocation6], 1
    %210 = vsyncpa [#allocation4], 1

</llo_original>
